<compile_context>
chip_gen: v6e
topology: v6e:2x2x1
jax: 0.10.0
libtpu: 0.0.40
codegen_flags: <defaults>
</compile_context>

<pallas_src>
import functools

import jax
import jax.numpy as jnp
from jax.experimental import pallas as pl
from jax.experimental.pallas import tpu as pltpu


def _round_up(n, m):
    return ((n + m - 1) // m) * m


def residual_mlp_kernel(x_ref, w_in_ref, b_in_ref, wh_ref, bh_ref,
                        w_out_ref, b_out_ref, nw_ref, o_ref, *, eps, inv_h):
    """One (block_m, D) activation tile; all weights VMEM-resident (bf16)."""
    x = x_ref[...]                                   # (tm, D) bf16
    tm = x.shape[0]
    H = w_in_ref.shape[1]

    # out = relu(input_layer(x)) -- bf16 MXU operands, f32 accumulation.
    out = jnp.dot(x, w_in_ref[...], preferred_element_type=jnp.float32)
    out = jnp.maximum(out + b_in_ref[...], 0.0)      # (tm, H) f32

    # Hoist the (1,H)->(tm,H) broadcast of the RMSNorm weight out of the
    # statically-unrolled layer loop (JAX does not CSE broadcast_in_dim).
    norm_w = jnp.broadcast_to(nw_ref[...], (tm, H))  # f32

    n_hidden = wh_ref.shape[0]                       # static Python int
    for l in range(n_hidden):                        # small static trip count
        residual = out
        # h = silu(layer(out))
        h = jnp.dot(out.astype(jnp.bfloat16), wh_ref[l],
                    preferred_element_type=jnp.float32)
        h = h + bh_ref[l]                            # (tm, H) f32
        h = h * jax.nn.sigmoid(h)                    # SiLU (EUP, f32)
        # RMSNorm(h): h * rsqrt(mean(h^2, -1) + eps) * weight
        ms = jnp.sum(h * h, axis=-1, keepdims=True) * inv_h
        out = residual + (h * jax.lax.rsqrt(ms + eps)) * norm_w

    # output_layer(out); cast to the requested output dtype (bf16 by default).
    logits = jnp.dot(out.astype(jnp.bfloat16), w_out_ref[...],
                     preferred_element_type=jnp.float32)
    o_ref[...] = (logits + b_out_ref[...]).astype(o_ref.dtype)


def prepare_params(params):
    """One-time conversion of PyTorch-convention params to kernel layout.

    Weights -> (in, out) bf16; biases / RMSNorm weight -> row-vector f32.
    Call once at init; residual_mlp_forward does no per-call transposes.
    """
    return {
        "w_in": jnp.asarray(params["w_in"].T, jnp.bfloat16),                  # (D, H)
        "b_in": jnp.asarray(params["b_in"].reshape(1, -1), jnp.float32),      # (1, H)
        "w_h": jnp.asarray(jnp.transpose(params["w_h"], (0, 2, 1)),
                           jnp.bfloat16),                                     # (L, H, H)
        "b_h": jnp.asarray(params["b_h"][:, None, :], jnp.float32),           # (L, 1, H)
        "w_out": jnp.asarray(params["w_out"].T, jnp.bfloat16),                # (H, V)
        "b_out": jnp.asarray(params["b_out"].reshape(1, -1), jnp.float32),    # (1, V)
        "norm_w": jnp.asarray(params["norm_w"].reshape(1, -1), jnp.float32),  # (1, H)
    }


def residual_mlp_forward(x, kparams, *, eps=1e-6, block_m=None,
                         out_dtype=jnp.bfloat16):
    """x: (B, 1, dim) float. kparams: output of prepare_params().

    Returns (B, vocab_size) logits in `out_dtype` (bf16 by default -- the
    kernel is bandwidth-bound, and the MXU already truncates to bf16; pass
    out_dtype=jnp.float32 for f32 logits).
    """
    # bf16 activations in: halves the input HBM stream; no accuracy change
    # since the first matmul feeds bf16 to the MXU anyway.
    x2d = jnp.squeeze(x, axis=1).astype(jnp.bfloat16)       # x.squeeze(1) -> (B, D)
    B, D = x2d.shape

    w_in, b_in = kparams["w_in"], kparams["b_in"]
    wh, bh = kparams["w_h"], kparams["b_h"]
    w_out, b_out = kparams["w_out"], kparams["b_out"]
    nw = kparams["norm_w"]

    H = w_in.shape[1]
    V = w_out.shape[1]
    L = wh.shape[0]

    if block_m is None:
        if B > 1024:
            # Measured mem-bound Pallas tiles: ~63% of HBM roofline at 256
            # rows, ~85% at 512.  (Bigger tiles risk vreg spills: 3 live
            # (block_m,128) f32 tiles; spills hide under DMA slack here.)
            block_m = 512
        elif B > 16:
            # Smallest 16-row-aligned tile giving >= 2 grid steps so the
            # "parallel" batch axis shards over both v7x TensorCores.
            block_m = max(16, _round_up(pl.cdiv(B, 2), 16))
        else:
            block_m = _round_up(max(B, 1), 8)
    num_m = pl.cdiv(B, block_m)
    # No jnp.pad / out[:B] round trips: Pallas masks the ragged last tile
    # (OOB reads are unspecified but row-local; OOB output rows are dropped).

    # VMEM budget: resident weights (+ default double-buffering), double-
    # buffered activation I/O tiles, f32 intermediates.  Raise v5e's 16 MiB
    # scoped default; stay well under v7x's 64 MiB physical VMEM.
    out_itemsize = jnp.dtype(out_dtype).itemsize
    weight_bytes = ((w_in.size + wh.size + w_out.size) * 2
                    + (b_in.size + bh.size + b_out.size + nw.size) * 4)
    act_bytes = 2 * block_m * (D * 2 + V * out_itemsize)
    scratch_bytes = 4 * block_m * H * 4 + block_m * V * 4
    vmem_limit = min(max(2 * (2 * weight_bytes + act_bytes + scratch_bytes),
                         32 << 20), 48 << 20)

    kernel = functools.partial(residual_mlp_kernel, eps=eps, inv_h=1.0 / H)

    out = pl.pallas_call(
        kernel,
        out_shape=jax.ShapeDtypeStruct((B, V), out_dtype),
        grid_spec=pltpu.PrefetchScalarGridSpec(
            num_scalar_prefetch=0,
            grid=(num_m,),
            in_specs=[
                # Activations: one row-tile per grid step (bf16).
                pl.BlockSpec((block_m, D), lambda i: (i, 0)),
                # Weights / biases: constant index_map -> VMEM-resident.
                pl.BlockSpec((D, H), lambda i: (0, 0)),
                pl.BlockSpec((1, H), lambda i: (0, 0)),
                pl.BlockSpec((L, H, H), lambda i: (0, 0, 0)),
                pl.BlockSpec((L, 1, H), lambda i: (0, 0, 0)),
                pl.BlockSpec((H, V), lambda i: (0, 0)),
                pl.BlockSpec((1, V), lambda i: (0, 0)),
                pl.BlockSpec((1, H), lambda i: (0, 0)),
            ],
            out_specs=pl.BlockSpec((block_m, V), lambda i: (i, 0)),
        ),
        compiler_params=pltpu.CompilerParams(
            # Batch tiles are independent -> parallel (both TCs on v7x).
            dimension_semantics=("parallel",),
            vmem_limit_bytes=int(vmem_limit)),
    )(x2d, w_in, b_in, wh, bh, w_out, b_out, nw)

    return out


def residual_mlp_reference(x, params, *, eps=1e-6):
    """Pure-JAX f32 reference mirroring the PyTorch forward exactly."""
    out = jnp.squeeze(x, axis=1)
    out = jax.nn.relu(out @ params["w_in"].T + params["b_in"])
    for l in range(params["w_h"].shape[0]):
        residual = out
        h = out @ params["w_h"][l].T + params["b_h"][l]
        h = jax.nn.silu(h)
        normed = h * jax.lax.rsqrt(jnp.mean(h * h, axis=-1, keepdims=True) + eps)
        out = residual + normed * params["norm_w"]
    return out @ params["w_out"].T + params["b_out"]


def residual_mlp_reference_mixed(x, kparams, *, eps=1e-6):
    """Pure-JAX reference using the SAME bf16-matmul / f32-elementwise recipe
    as the kernel (f32 logits), for a tight check of the Pallas plumbing."""
    out = jnp.squeeze(x, axis=1).astype(jnp.bfloat16)
    H = kparams["w_in"].shape[1]
    out = jnp.dot(out, kparams["w_in"], preferred_element_type=jnp.float32)
    out = jnp.maximum(out + kparams["b_in"], 0.0)
    for l in range(kparams["w_h"].shape[0]):
        residual = out
        h = jnp.dot(out.astype(jnp.bfloat16), kparams["w_h"][l],
                    preferred_element_type=jnp.float32)
        h = h + kparams["b_h"][l]
        h = h * jax.nn.sigmoid(h)
        ms = jnp.sum(h * h, axis=-1, keepdims=True) * (1.0 / H)
        out = residual + (h * jax.lax.rsqrt(ms + eps)) * kparams["norm_w"]
    logits = jnp.dot(out.astype(jnp.bfloat16), kparams["w_out"],
                     preferred_element_type=jnp.float32)
    return logits + kparams["b_out"]


def init_params(key, dim, vocab_size, n_layers):
    """Deterministic synthetic parameters with PyTorch nn.Linear shape conventions."""
    keys = jax.random.split(key, 6)
    scale_in = 1.0 / jnp.sqrt(dim)
    return {
        "w_in": jax.random.uniform(keys[0], (dim, dim), jnp.float32,
                                   -scale_in, scale_in),          # (out=H, in=D)
        "b_in": jax.random.uniform(keys[1], (dim,), jnp.float32,
                                   -scale_in, scale_in),
        "w_h": jax.random.uniform(keys[2], (n_layers - 1, dim, dim), jnp.float32,
                                  -scale_in, scale_in),           # (L-1, out=H, in=H)
        "b_h": jax.random.uniform(keys[3], (n_layers - 1, dim), jnp.float32,
                                  -scale_in, scale_in),
        "w_out": jax.random.uniform(keys[4], (vocab_size, dim), jnp.float32,
                                    -scale_in, scale_in),         # (out=V, in=H)
        "b_out": jax.random.uniform(keys[5], (vocab_size,), jnp.float32,
                                    -scale_in, scale_in),
        "norm_w": jnp.ones((dim,), jnp.float32),                  # RMSNorm weight
    }


if __name__ == "__main__":
    # decoder_config: dim = hidden = 128, vocab_size = 256, n_layers = 3, norm_eps = 1e-6
    B, DIM, VOCAB, N_LAYERS, EPS = 8, 128, 256, 3, 1e-6

    key = jax.random.PRNGKey(0)
    kx, kp = jax.random.split(key)
    x = jax.random.normal(kx, (B, 1, DIM), jnp.float32)   # PyTorch-style (B, 1, dim)
    params = init_params(kp, DIM, VOCAB, N_LAYERS)

    # One-time weight prep (transpose + bf16 cast) -- no per-call transposes.
    kparams = prepare_params(params)

    # ---- Test 1: decoder_config shapes, default bf16 logits ----------------
    out = residual_mlp_forward(x, kparams, eps=EPS)
    out = jax.block_until_ready(out)
    assert out.shape == (B, VOCAB)
    assert out.dtype == jnp.bfloat16
    out_f32 = out.astype(jnp.float32)

    # Tight-ish check vs a JAX reference using the identical bf16-matmul
    # recipe (only difference: final bf16 cast of the logits).
    ref_mixed = residual_mlp_reference_mixed(x, kparams, eps=EPS)
    assert jnp.allclose(out_f32, ref_mixed, atol=3e-2, rtol=3e-2), \
        "mismatch vs bf16-matmul JAX reference"

    # Loose check vs the full-f32 PyTorch-equivalent reference (bf16 MXU inputs
    # + bf16 logits intentionally deviate from exact f32 parity).
    ref_f32 = residual_mlp_reference(x, params, eps=EPS)
    assert jnp.allclose(out_f32, ref_f32, atol=1e-1, rtol=1e-1), \
        "mismatch vs f32 JAX reference"

    # ---- Test 2: ragged batch (B not a multiple of block_m), two grid steps,
    #      f32 logits, no pad/slice round trips ------------------------------
    B2 = 48
    x2 = jax.random.normal(jax.random.PRNGKey(1), (B2, 1, DIM), jnp.float32)
    out2 = residual_mlp_forward(x2, kparams, eps=EPS, block_m=32,
                                out_dtype=jnp.float32)
    out2 = jax.block_until_ready(out2)
    assert out2.shape == (B2, VOCAB)
    ref2 = residual_mlp_reference_mixed(x2, kparams, eps=EPS)
    assert jnp.allclose(out2, ref2, atol=1e-3, rtol=1e-3), \
        "mismatch on ragged-batch path"

    print("KERNEL_OK")
</pallas_src>

<mosaic_0001>
module attributes {stable_mosaic.version = 11 : i64} {
  func.func @residual_mlp_kernel(%arg0: i32, %arg1: memref<8x128xbf16, #tpu.memory_space<vmem>>, %arg2: memref<128x128xbf16, #tpu.memory_space<vmem>>, %arg3: memref<1x128xf32, #tpu.memory_space<vmem>>, %arg4: memref<2x128x128xbf16, #tpu.memory_space<vmem>>, %arg5: memref<2x1x128xf32, #tpu.memory_space<vmem>>, %arg6: memref<128x256xbf16, #tpu.memory_space<vmem>>, %arg7: memref<1x256xf32, #tpu.memory_space<vmem>>, %arg8: memref<1x128xf32, #tpu.memory_space<vmem>>, %arg9: memref<8x256xbf16, #tpu.memory_space<vmem>>) attributes {dimension_semantics = [#tpu.dimension_semantics<parallel>], iteration_bounds = array<i64: 1>, scalar_prefetch = 0 : i64, scratch_operands = 0 : i64, tpu.core_type = #tpu.core_type<tc>, window_params = [{transform_indices = @transform_0, window_bounds = array<i64: 8, 128>}, {pipeline_mode = #tpu.pipeline_mode<synchronous>, transform_indices = @transform_1, window_bounds = array<i64: 128, 128>}, {pipeline_mode = #tpu.pipeline_mode<synchronous>, transform_indices = @transform_2, window_bounds = array<i64: 1, 128>}, {pipeline_mode = #tpu.pipeline_mode<synchronous>, transform_indices = @transform_3, window_bounds = array<i64: 2, 128, 128>}, {pipeline_mode = #tpu.pipeline_mode<synchronous>, transform_indices = @transform_4, window_bounds = array<i64: 2, 1, 128>}, {pipeline_mode = #tpu.pipeline_mode<synchronous>, transform_indices = @transform_5, window_bounds = array<i64: 128, 256>}, {pipeline_mode = #tpu.pipeline_mode<synchronous>, transform_indices = @transform_6, window_bounds = array<i64: 1, 256>}, {pipeline_mode = #tpu.pipeline_mode<synchronous>, transform_indices = @transform_7, window_bounds = array<i64: 1, 128>}, {transform_indices = @transform_8, window_bounds = array<i64: 8, 256>}]} {
    %c0 = arith.constant 0 : index
    %c0_0 = arith.constant 0 : index
    %0 = vector.load %arg1[%c0, %c0_0] : memref<8x128xbf16, #tpu.memory_space<vmem>>, vector<8x128xbf16>
    %c0_1 = arith.constant 0 : index
    %c0_2 = arith.constant 0 : index
    %1 = vector.load %arg2[%c0_1, %c0_2] : memref<128x128xbf16, #tpu.memory_space<vmem>>, vector<128x128xbf16>
    %cst = arith.constant dense<0.000000e+00> : vector<8x128xf32>
    %2 = tpu.matmul %0, %1, %cst {dimension_numbers = #tpu.dot_dimension_numbers<[1], [0], [0], [1], [0, 0, 1, 1], [], []>} : vector<8x128xbf16>, vector<128x128xbf16>, vector<8x128xf32> -> vector<8x128xf32>
    %c0_3 = arith.constant 0 : index
    %c0_4 = arith.constant 0 : index
    %3 = vector.load %arg3[%c0_3, %c0_4] : memref<1x128xf32, #tpu.memory_space<vmem>>, vector<1x128xf32>
    %4 = vector.broadcast %3 : vector<1x128xf32> to vector<8x128xf32>
    %5 = arith.addf %2, %4 : vector<8x128xf32>
    %cst_5 = arith.constant 0.000000e+00 : f32
    %6 = vector.broadcast %cst_5 : f32 to vector<8x128xf32>
    %7 = arith.maximumf %5, %6 : vector<8x128xf32>
    %c0_6 = arith.constant 0 : index
    %c0_7 = arith.constant 0 : index
    %8 = vector.load %arg8[%c0_6, %c0_7] : memref<1x128xf32, #tpu.memory_space<vmem>>, vector<1x128xf32>
    %9 = vector.shape_cast %8 : vector<1x128xf32> to vector<1x128xf32>
    %10 = vector.broadcast %9 : vector<1x128xf32> to vector<8x128xf32>
    %11 = arith.truncf %7 : vector<8x128xf32> to vector<8x128xbf16>
    %c0_8 = arith.constant 0 : index
    %c0_9 = arith.constant 0 : index
    %c0_10 = arith.constant 0 : index
    %12 = vector.load %arg4[%c0_8, %c0_9, %c0_10] : memref<2x128x128xbf16, #tpu.memory_space<vmem>>, vector<1x128x128xbf16>
    %13 = vector.shape_cast %12 : vector<1x128x128xbf16> to vector<128x128xbf16>
    %cst_11 = arith.constant dense<0.000000e+00> : vector<8x128xf32>
    %14 = tpu.matmul %11, %13, %cst_11 {dimension_numbers = #tpu.dot_dimension_numbers<[1], [0], [0], [1], [0, 0, 1, 1], [], []>} : vector<8x128xbf16>, vector<128x128xbf16>, vector<8x128xf32> -> vector<8x128xf32>
    %c0_12 = arith.constant 0 : index
    %c0_13 = arith.constant 0 : index
    %c0_14 = arith.constant 0 : index
    %15 = vector.load %arg5[%c0_12, %c0_13, %c0_14] : memref<2x1x128xf32, #tpu.memory_space<vmem>>, vector<1x1x128xf32>
    %16 = vector.shape_cast %15 : vector<1x1x128xf32> to vector<1x128xf32>
    %17 = vector.broadcast %16 : vector<1x128xf32> to vector<8x128xf32>
    %18 = arith.addf %14, %17 : vector<8x128xf32>
    %19 = arith.negf %18 : vector<8x128xf32>
    %20 = math.exp %19 : vector<8x128xf32>
    %cst_15 = arith.constant 1.000000e+00 : f32
    %21 = vector.broadcast %cst_15 : f32 to vector<8x128xf32>
    %22 = arith.addf %21, %20 : vector<8x128xf32>
    %23 = arith.divf %21, %22 : vector<8x128xf32>
    %24 = arith.mulf %18, %23 : vector<8x128xf32>
    %25 = arith.mulf %24, %24 : vector<8x128xf32>
    %cst_16 = arith.constant dense<0.000000e+00> : vector<8xf32>
    %26 = vector.multi_reduction <add>, %25, %cst_16 [1] : vector<8x128xf32> to vector<8xf32>
    %27 = vector.shape_cast %26 : vector<8xf32> to vector<8x1xf32>
    %cst_17 = arith.constant 7.812500e-03 : f32
    %28 = vector.broadcast %cst_17 : f32 to vector<8x1xf32>
    %29 = arith.mulf %27, %28 : vector<8x1xf32>
    %cst_18 = arith.constant 9.99999997E-7 : f32
    %30 = vector.broadcast %cst_18 : f32 to vector<8x1xf32>
    %31 = arith.addf %29, %30 : vector<8x1xf32>
    %32 = math.rsqrt %31 : vector<8x1xf32>
    %33 = vector.broadcast %32 : vector<8x1xf32> to vector<8x128xf32>
    %34 = arith.mulf %24, %33 : vector<8x128xf32>
    %35 = arith.mulf %34, %10 : vector<8x128xf32>
    %36 = arith.addf %7, %35 : vector<8x128xf32>
    %37 = arith.truncf %36 : vector<8x128xf32> to vector<8x128xbf16>
    %c1 = arith.constant 1 : index
    %c0_19 = arith.constant 0 : index
    %c0_20 = arith.constant 0 : index
    %38 = vector.load %arg4[%c1, %c0_19, %c0_20] : memref<2x128x128xbf16, #tpu.memory_space<vmem>>, vector<1x128x128xbf16>
    %39 = vector.shape_cast %38 : vector<1x128x128xbf16> to vector<128x128xbf16>
    %cst_21 = arith.constant dense<0.000000e+00> : vector<8x128xf32>
    %40 = tpu.matmul %37, %39, %cst_21 {dimension_numbers = #tpu.dot_dimension_numbers<[1], [0], [0], [1], [0, 0, 1, 1], [], []>} : vector<8x128xbf16>, vector<128x128xbf16>, vector<8x128xf32> -> vector<8x128xf32>
    %c1_22 = arith.constant 1 : index
    %c0_23 = arith.constant 0 : index
    %c0_24 = arith.constant 0 : index
    %41 = vector.load %arg5[%c1_22, %c0_23, %c0_24] : memref<2x1x128xf32, #tpu.memory_space<vmem>>, vector<1x1x128xf32>
    %42 = vector.shape_cast %41 : vector<1x1x128xf32> to vector<1x128xf32>
    %43 = vector.broadcast %42 : vector<1x128xf32> to vector<8x128xf32>
    %44 = arith.addf %40, %43 : vector<8x128xf32>
    %45 = arith.negf %44 : vector<8x128xf32>
    %46 = math.exp %45 : vector<8x128xf32>
    %cst_25 = arith.constant 1.000000e+00 : f32
    %47 = vector.broadcast %cst_25 : f32 to vector<8x128xf32>
    %48 = arith.addf %47, %46 : vector<8x128xf32>
    %49 = arith.divf %47, %48 : vector<8x128xf32>
    %50 = arith.mulf %44, %49 : vector<8x128xf32>
    %51 = arith.mulf %50, %50 : vector<8x128xf32>
    %cst_26 = arith.constant dense<0.000000e+00> : vector<8xf32>
    %52 = vector.multi_reduction <add>, %51, %cst_26 [1] : vector<8x128xf32> to vector<8xf32>
    %53 = vector.shape_cast %52 : vector<8xf32> to vector<8x1xf32>
    %cst_27 = arith.constant 7.812500e-03 : f32
    %54 = vector.broadcast %cst_27 : f32 to vector<8x1xf32>
    %55 = arith.mulf %53, %54 : vector<8x1xf32>
    %cst_28 = arith.constant 9.99999997E-7 : f32
    %56 = vector.broadcast %cst_28 : f32 to vector<8x1xf32>
    %57 = arith.addf %55, %56 : vector<8x1xf32>
    %58 = math.rsqrt %57 : vector<8x1xf32>
    %59 = vector.broadcast %58 : vector<8x1xf32> to vector<8x128xf32>
    %60 = arith.mulf %50, %59 : vector<8x128xf32>
    %61 = arith.mulf %60, %10 : vector<8x128xf32>
    %62 = arith.addf %36, %61 : vector<8x128xf32>
    %63 = arith.truncf %62 : vector<8x128xf32> to vector<8x128xbf16>
    %c0_29 = arith.constant 0 : index
    %c0_30 = arith.constant 0 : index
    %64 = vector.load %arg6[%c0_29, %c0_30] : memref<128x256xbf16, #tpu.memory_space<vmem>>, vector<128x256xbf16>
    %cst_31 = arith.constant dense<0.000000e+00> : vector<8x256xf32>
    %65 = tpu.matmul %63, %64, %cst_31 {dimension_numbers = #tpu.dot_dimension_numbers<[1], [0], [0], [1], [0, 0, 1, 1], [], []>} : vector<8x128xbf16>, vector<128x256xbf16>, vector<8x256xf32> -> vector<8x256xf32>
    %c0_32 = arith.constant 0 : index
    %c0_33 = arith.constant 0 : index
    %66 = vector.load %arg7[%c0_32, %c0_33] : memref<1x256xf32, #tpu.memory_space<vmem>>, vector<1x256xf32>
    %67 = vector.broadcast %66 : vector<1x256xf32> to vector<8x256xf32>
    %68 = arith.addf %65, %67 : vector<8x256xf32>
    %69 = arith.truncf %68 : vector<8x256xf32> to vector<8x256xbf16>
    %c0_34 = arith.constant 0 : index
    %c0_35 = arith.constant 0 : index
    %70 = vector.load %arg9[%c0_34, %c0_35] : memref<8x256xbf16, #tpu.memory_space<vmem>>, vector<8x256xbf16>
    tpu.vector_store %arg9[%c0_34, %c0_35], %69 {strides = array<i32>} : memref<8x256xbf16, #tpu.memory_space<vmem>>, vector<8x256xbf16>,
    return
  }
  func.func @transform_0(%arg0: i32) -> (i32, i32) {
    %c0_i32 = arith.constant 0 : i32
    %c0_i32_0 = arith.constant 0 : i32
    return %arg0, %c0_i32 : i32, i32
  }
  func.func @transform_1(%arg0: i32) -> (i32, i32) {
    %c0_i32 = arith.constant 0 : i32
    %c0_i32_0 = arith.constant 0 : i32
    %c0_i32_1 = arith.constant 0 : i32
    return %c0_i32, %c0_i32_0 : i32, i32
  }
  func.func @transform_2(%arg0: i32) -> (i32, i32) {
    %c0_i32 = arith.constant 0 : i32
    %c0_i32_0 = arith.constant 0 : i32
    %c0_i32_1 = arith.constant 0 : i32
    return %c0_i32, %c0_i32_0 : i32, i32
  }
  func.func @transform_3(%arg0: i32) -> (i32, i32, i32) {
    %c0_i32 = arith.constant 0 : i32
    %c0_i32_0 = arith.constant 0 : i32
    %c0_i32_1 = arith.constant 0 : i32
    %c0_i32_2 = arith.constant 0 : i32
    return %c0_i32, %c0_i32_0, %c0_i32_1 : i32, i32, i32
  }
  func.func @transform_4(%arg0: i32) -> (i32, i32, i32) {
    %c0_i32 = arith.constant 0 : i32
    %c0_i32_0 = arith.constant 0 : i32
    %c0_i32_1 = arith.constant 0 : i32
    %c0_i32_2 = arith.constant 0 : i32
    return %c0_i32, %c0_i32_0, %c0_i32_1 : i32, i32, i32
  }
  func.func @transform_5(%arg0: i32) -> (i32, i32) {
    %c0_i32 = arith.constant 0 : i32
    %c0_i32_0 = arith.constant 0 : i32
    %c0_i32_1 = arith.constant 0 : i32
    return %c0_i32, %c0_i32_0 : i32, i32
  }
  func.func @transform_6(%arg0: i32) -> (i32, i32) {
    %c0_i32 = arith.constant 0 : i32
    %c0_i32_0 = arith.constant 0 : i32
    %c0_i32_1 = arith.constant 0 : i32
    return %c0_i32, %c0_i32_0 : i32, i32
  }
  func.func @transform_7(%arg0: i32) -> (i32, i32) {
    %c0_i32 = arith.constant 0 : i32
    %c0_i32_0 = arith.constant 0 : i32
    %c0_i32_1 = arith.constant 0 : i32
    return %c0_i32, %c0_i32_0 : i32, i32
  }
  func.func @transform_8(%arg0: i32) -> (i32, i32) {
    %c0_i32 = arith.constant 0 : i32
    %c0_i32_0 = arith.constant 0 : i32
    return %arg0, %c0_i32 : i32, i32
  }
}

</mosaic_0001>

<llo_original>
// kernel: tpu_custom_call.1
$region0: #{tpu_custom_call.1}
  #allocation0 [shape = 'u32[]', space=smem, size = 0x4, offset = 0x4, fixed_abs, tag = 'smem constant byte address 0x4 - core index']
  #allocation1 [shape = 'u32[144,128]{1,0:T(1,128)}', space=vmem, size = 0x12000, scoped, tag = 'internal scratch']
  %s0 = inlined_call_operand.hbm [shape: bf16[8,128], index: 0, kind: input, shape index: {}]
  %s1 = inlined_call_operand.hbm [shape: bf16[128,128], index: 1, kind: input, shape index: {}]
  %s2 = inlined_call_operand.vmem [shape: f32[1,128], index: 2, kind: input, shape index: {}]
  %s3 = inlined_call_operand.hbm [shape: bf16[2,128,128], index: 3, kind: input, shape index: {}]
  %s4 = inlined_call_operand.vmem [shape: f32[2,1,128], index: 4, kind: input, shape index: {}]
  %s5 = inlined_call_operand.hbm [shape: bf16[128,256], index: 5, kind: input, shape index: {}]
  %s6 = inlined_call_operand.vmem [shape: f32[1,256], index: 6, kind: input, shape index: {}]
  %s7 = inlined_call_operand.vmem [shape: f32[1,128], index: 7, kind: input, shape index: {}]
  %s8 = inlined_call_operand.hbm [shape: bf16[8,256], index: 8, kind: output, shape index: {}]
  %s9 = sld [smem:[#allocation0]]
  $region58: #{tpu_custom_call.1} parent=0
    _
  %s11 = ssub.s32 1, %s9
  %s12 = scalar_select 0, %s11, %s9
  $region1: #{tpu_custom_call.1} parent=0
    #allocation2 [shape = 'u8[2048]{0}', space=vmem, size = 0x800, scoped, tag = 'input window, operand 0, single buffered']
    #allocation3 [shape = 's32[1]{0}', space=sflag, size = 0x4, scoped, tag = 'scoped memory for tpu_custom_call.1']
    #allocation4 [shape = 's32[1]{0}', space=sflag, size = 0x4, scoped, tag = 'scoped memory for tpu_custom_call.1']
    #allocation5 [shape = 'u8[32768]{0}', space=vmem, size = 0x8000, scoped, tag = 'input window, operand 1, single buffered']
    #allocation6 [shape = 's32[1]{0}', space=sflag, size = 0x4, scoped, tag = 'scoped memory for tpu_custom_call.1']
    #allocation7 [shape = 'u8[65536]{0}', space=vmem, size = 0x10000, scoped, tag = 'input window, operand 3, single buffered']
    #allocation8 [shape = 'u8[65536]{0}', space=vmem, size = 0x10000, scoped, tag = 'input window, operand 5, single buffered']
    #allocation9 [shape = 's32[1]{0}', space=sflag, size = 0x4, scoped, tag = 'scoped memory for tpu_custom_call.1']
    #allocation10 [shape = 'u8[4096]{0}', space=vmem, size = 0x1000, scoped, tag = 'output window, operand 0, single buffered']
    %13 = vsyncpa [#allocation3], 0
    %14 = vsyncpa [#allocation6], 0
    %15 = vsyncpa [#allocation9], 0
    %16 = vsyncpa [#allocation4], 0
    // Predicated region
    $region2: #{tpu_custom_call.1} parent=1 // pred_check
      _
    $region3: #{tpu_custom_call.1} parent=1 // pred_check_branch
      %18 = sbr.rel (0) target = $region5
    $region4: #{tpu_custom_call.1} parent=1 // pred_region
      %s20 = ssub.s32 64, 64
      %21 = vsyncadd [#allocation3], %s20
      %s23 = sshll.u32 [#allocation2], 4
      %s24 = int_to_ptr.vmem [resolvable:$true] %s23
      %26 = dma.hbm_to_vmem [thread:$0]  %s0, 64, %s24, [#allocation3]
    $region5: #{tpu_custom_call.1} parent=1 // pred_fallthru
      _
    // Predicated region
    $region6: #{tpu_custom_call.1} parent=1 // pred_check
      _
    $region7: #{tpu_custom_call.1} parent=1 // pred_check_branch
      %28 = sbr.rel (0) target = $region9
    $region8: #{tpu_custom_call.1} parent=1 // pred_region
      %s30 = ssub.s32 1024, 1024
      %31 = vsyncadd [#allocation6], %s30
      %s32 = sshll.u32 [#allocation5], 4
      %s33 = int_to_ptr.vmem [resolvable:$true] %s32
      %38 = dma.hbm_to_vmem [thread:$0]  %s1, 1024, %s33, [#allocation6], 64, 64, 4
    $region9: #{tpu_custom_call.1} parent=1 // pred_fallthru
      _
    // Predicated region
    $region10: #{tpu_custom_call.1} parent=1 // pred_check
      _
    $region11: #{tpu_custom_call.1} parent=1 // pred_check_branch
      %40 = sbr.rel (0) target = $region13
    $region12: #{tpu_custom_call.1} parent=1 // pred_region
      _
    $region13: #{tpu_custom_call.1} parent=1 // pred_fallthru
      _
    // Predicated region
    $region14: #{tpu_custom_call.1} parent=1 // pred_check
      _
    $region15: #{tpu_custom_call.1} parent=1 // pred_check_branch
      %42 = sbr.rel (0) target = $region17
    $region16: #{tpu_custom_call.1} parent=1 // pred_region
      %s44 = ssub.s32 2048, 2048
      %45 = vsyncadd [#allocation6], %s44
      %s46 = sshll.u32 [#allocation7], 4
      %s47 = int_to_ptr.vmem [resolvable:$true] %s46
      %52 = dma.hbm_to_vmem [thread:$0]  %s3, 2048, %s47, [#allocation6], 64, 64, 4
    $region17: #{tpu_custom_call.1} parent=1 // pred_fallthru
      _
    // Predicated region
    $region18: #{tpu_custom_call.1} parent=1 // pred_check
      _
    $region19: #{tpu_custom_call.1} parent=1 // pred_check_branch
      %54 = sbr.rel (0) target = $region21
    $region20: #{tpu_custom_call.1} parent=1 // pred_region
      _
    $region21: #{tpu_custom_call.1} parent=1 // pred_fallthru
      _
    // Predicated region
    $region22: #{tpu_custom_call.1} parent=1 // pred_check
      _
    $region23: #{tpu_custom_call.1} parent=1 // pred_check_branch
      %56 = sbr.rel (0) target = $region25
    $region24: #{tpu_custom_call.1} parent=1 // pred_region
      %s58 = ssub.s32 2048, 2048
      %59 = vsyncadd [#allocation9], %s58
      %s60 = sshll.u32 [#allocation8], 4
      %s61 = int_to_ptr.vmem [resolvable:$true] %s60
      %66 = dma.hbm_to_vmem [thread:$0]  %s5, 2048, %s61, [#allocation9], 128, 128, 8
    $region25: #{tpu_custom_call.1} parent=1 // pred_fallthru
      _
    // Predicated region
    $region26: #{tpu_custom_call.1} parent=1 // pred_check
      _
    $region27: #{tpu_custom_call.1} parent=1 // pred_check_branch
      %68 = sbr.rel (0) target = $region29
    $region28: #{tpu_custom_call.1} parent=1 // pred_region
      _
    $region29: #{tpu_custom_call.1} parent=1 // pred_fallthru
      _
    // Predicated region
    $region30: #{tpu_custom_call.1} parent=1 // pred_check
      _
    $region31: #{tpu_custom_call.1} parent=1 // pred_check_branch
      %70 = sbr.rel (0) target = $region33
    $region32: #{tpu_custom_call.1} parent=1 // pred_region
      _
    $region33: #{tpu_custom_call.1} parent=1 // pred_fallthru
      _
    // Predicated region
    $region34: #{tpu_custom_call.1} parent=1 // pred_check
      _
    $region35: #{tpu_custom_call.1} parent=1 // pred_check_branch
      %72 = sbr.rel (0) target = $region37
    $region36: #{tpu_custom_call.1} parent=1 // pred_region
      %73 = dma.done [#allocation3], 64
    $region37: #{tpu_custom_call.1} parent=1 // pred_fallthru
      _
    // Predicated region
    $region38: #{tpu_custom_call.1} parent=1 // pred_check
      _
    $region39: #{tpu_custom_call.1} parent=1 // pred_check_branch
      %75 = sbr.rel (0) target = $region41
    $region40: #{tpu_custom_call.1} parent=1 // pred_region
      %76 = dma.done [#allocation6], 1024
    $region41: #{tpu_custom_call.1} parent=1 // pred_fallthru
      _
    // Predicated region
    $region42: #{tpu_custom_call.1} parent=1 // pred_check
      _
    $region43: #{tpu_custom_call.1} parent=1 // pred_check_branch
      %78 = sbr.rel (0) target = $region45
    $region44: #{tpu_custom_call.1} parent=1 // pred_region
      %79 = dma.done [#allocation6], 2048
    $region45: #{tpu_custom_call.1} parent=1 // pred_fallthru
      _
    // Predicated region
    $region46: #{tpu_custom_call.1} parent=1 // pred_check
      _
    $region47: #{tpu_custom_call.1} parent=1 // pred_check_branch
      %81 = sbr.rel (0) target = $region49
    $region48: #{tpu_custom_call.1} parent=1 // pred_region
      %82 = dma.done [#allocation9], 2048
    $region49: #{tpu_custom_call.1} parent=1 // pred_fallthru
      _
    %v84 = vld [vmem:[#allocation2] sm:$0xf]
    %v85 = vld [vmem:[#allocation5] sm:$0xf]
    %v86 = vld [vmem:[#allocation5 + $0x4] sm:$0xf]
    %v87 = vld [vmem:[#allocation5 + $0x8] sm:$0xf]
    %v88 = vld [vmem:[#allocation5 + $0xc] sm:$0xf]
    %v89 = vld [vmem:[#allocation5 + $0x10] sm:$0xf]
    %v90 = vld [vmem:[#allocation5 + $0x14] sm:$0xf]
    %v91 = vld [vmem:[#allocation5 + $0x18] sm:$0xf]
    %v92 = vld [vmem:[#allocation5 + $0x1c] sm:$0xf]
    %v93 = vld [vmem:[#allocation5 + $0x20] sm:$0xf]
    %v94 = vld [vmem:[#allocation5 + $0x24] sm:$0xf]
    %v95 = vld [vmem:[#allocation5 + $0x28] sm:$0xf]
    %v96 = vld [vmem:[#allocation5 + $0x2c] sm:$0xf]
    %v97 = vld [vmem:[#allocation5 + $0x30] sm:$0xf]
    %v98 = vld [vmem:[#allocation5 + $0x34] sm:$0xf]
    %v99 = vld [vmem:[#allocation5 + $0x38] sm:$0xf]
    %v100 = vld [vmem:[#allocation5 + $0x3c] sm:$0xf]
    %v101 = vld [vmem:[%s2] sm:$0x1]
    %v103 = vlaneseq
    %v104 = vshrl.u32 %v103, 7
    %v105 = vsub.s32 0, %v104
    %v106 = vrot.slane %v101, %v105
    %v124 = vunpack.c.l.b16 %v85
    %v125 = vunpack.c.l.b16 %v86
    %v126 = vunpack.c.l.b16 %v87
    %v127 = vunpack.c.l.b16 %v88
    %v128 = vunpack.c.l.b16 %v89
    %v129 = vunpack.c.l.b16 %v90
    %v130 = vunpack.c.l.b16 %v91
    %v131 = vunpack.c.l.b16 %v92
    %v132 = vunpack.c.l.b16 %v93
    %v133 = vunpack.c.l.b16 %v94
    %v134 = vunpack.c.l.b16 %v95
    %v135 = vunpack.c.l.b16 %v96
    %v136 = vunpack.c.l.b16 %v97
    %v137 = vunpack.c.l.b16 %v98
    %v138 = vunpack.c.l.b16 %v99
    %v139 = vunpack.c.l.b16 %v100
    %v140 = vpack.c.b16 %v125, %v124
    %v141 = vpack.c.b16 %v127, %v126
    %v142 = vpack.c.b16 %v129, %v128
    %v143 = vpack.c.b16 %v131, %v130
    %v144 = vpack.c.b16 %v133, %v132
    %v145 = vpack.c.b16 %v135, %v134
    %v146 = vpack.c.b16 %v137, %v136
    %v147 = vpack.c.b16 %v139, %v138
    %156 = vmatprep.subr.bf16.mxu0 0
    %157 = vmatpush1.bf16.msra.mxu0 %v147
    %158 = vmatprep.subr.bf16.mxu0 0
    %159 = vmatpush1.bf16.msra.mxu0 %v146
    %160 = vmatprep.subr.bf16.mxu0 0
    %161 = vmatpush1.bf16.msra.mxu0 %v145
    %162 = vmatprep.subr.bf16.mxu0 0
    %163 = vmatpush1.bf16.msra.mxu0 %v144
    %164 = vmatprep.subr.bf16.mxu0 0
    %165 = vmatpush1.bf16.msra.mxu0 %v143
    %166 = vmatprep.subr.bf16.mxu0 0
    %167 = vmatpush1.bf16.msra.mxu0 %v142
    %168 = vmatprep.subr.bf16.mxu0 0
    %169 = vmatpush1.bf16.msra.mxu0 %v141
    %170 = vmatprep.subr.bf16.mxu0 0
    %171 = vmatpush1.bf16.msra.mxu0 %v140
    %172 = vmatprep.subr.bf16.mxu0 0
    %173 = vmatpush2.bf16.msra.mxu0 0
    %174 = vmatprep.subr.bf16.mxu0 0
    %175 = vmatpush2.bf16.msra.mxu0 0
    %176 = vmatprep.subr.bf16.mxu0 0
    %177 = vmatpush2.bf16.msra.mxu0 0
    %178 = vmatprep.subr.bf16.mxu0 0
    %179 = vmatpush2.bf16.msra.mxu0 0
    %180 = vmatprep.subr.bf16.mxu0 0
    %181 = vmatpush2.bf16.msra.mxu0 0
    %182 = vmatprep.subr.bf16.mxu0 0
    %183 = vmatpush2.bf16.msra.mxu0 0
    %184 = vmatprep.subr.bf16.mxu0 0
    %185 = vmatpush2.bf16.msra.mxu0 0
    %186 = vmatprep.subr.bf16.mxu0 0
    %187 = vmatpush2.bf16.msra.mxu0 0
    %188 = vmatprep.mubr.bf16.mxu0 0
    %189 = vmatmul.mubr.bf16.gmra.mxu0 %v84
    %v190 = vpop.f32.mrf.mxu0
    %v191 = vadd.f32 %v106, %v190
    %v192 = vpop.f32.mrf.mxu0
    %v193 = vpop.f32.mrf.mxu0
    %v194 = vpop.f32.mrf.mxu0
    %195 = vdwg.mxu0
    %v196 = vmax.f32 %v191, 0.0
    %v197 = vld [vmem:[%s7] sm:$0x1]
    %v199 = vlaneseq
    %v200 = vshrl.u32 %v199, 7
    %v201 = vsub.s32 0, %v200
    %v202 = vrot.slane %v197, %v201
    %v204 = vpack.c.bf16 %v196, %v196
    %v205 = vld [vmem:[#allocation7] sm:$0xf]
    %v206 = vld [vmem:[#allocation7 + $0x4] sm:$0xf]
    %v207 = vld [vmem:[#allocation7 + $0x8] sm:$0xf]
    %v208 = vld [vmem:[#allocation7 + $0xc] sm:$0xf]
    %v209 = vld [vmem:[#allocation7 + $0x10] sm:$0xf]
    %v210 = vld [vmem:[#allocation7 + $0x14] sm:$0xf]
    %v211 = vld [vmem:[#allocation7 + $0x18] sm:$0xf]
    %v212 = vld [vmem:[#allocation7 + $0x1c] sm:$0xf]
    %v213 = vld [vmem:[#allocation7 + $0x20] sm:$0xf]
    %v214 = vld [vmem:[#allocation7 + $0x24] sm:$0xf]
    %v215 = vld [vmem:[#allocation7 + $0x28] sm:$0xf]
    %v216 = vld [vmem:[#allocation7 + $0x2c] sm:$0xf]
    %v217 = vld [vmem:[#allocation7 + $0x30] sm:$0xf]
    %v218 = vld [vmem:[#allocation7 + $0x34] sm:$0xf]
    %v219 = vld [vmem:[#allocation7 + $0x38] sm:$0xf]
    %v220 = vld [vmem:[#allocation7 + $0x3c] sm:$0xf]
    %v221 = vld [vmem:[%s4] sm:$0x1]
    %v223 = vlaneseq
    %v224 = vshrl.u32 %v223, 7
    %v225 = vsub.s32 0, %v224
    %v226 = vrot.slane %v221, %v225
    %v244 = vunpack.c.l.b16 %v205
    %v245 = vunpack.c.l.b16 %v206
    %v246 = vunpack.c.l.b16 %v207
    %v247 = vunpack.c.l.b16 %v208
    %v248 = vunpack.c.l.b16 %v209
    %v249 = vunpack.c.l.b16 %v210
    %v250 = vunpack.c.l.b16 %v211
    %v251 = vunpack.c.l.b16 %v212
    %v252 = vunpack.c.l.b16 %v213
    %v253 = vunpack.c.l.b16 %v214
    %v254 = vunpack.c.l.b16 %v215
    %v255 = vunpack.c.l.b16 %v216
    %v256 = vunpack.c.l.b16 %v217
    %v257 = vunpack.c.l.b16 %v218
    %v258 = vunpack.c.l.b16 %v219
    %v259 = vunpack.c.l.b16 %v220
    %v260 = vpack.c.b16 %v245, %v244
    %v261 = vpack.c.b16 %v247, %v246
    %v262 = vpack.c.b16 %v249, %v248
    %v263 = vpack.c.b16 %v251, %v250
    %v264 = vpack.c.b16 %v253, %v252
    %v265 = vpack.c.b16 %v255, %v254
    %v266 = vpack.c.b16 %v257, %v256
    %v267 = vpack.c.b16 %v259, %v258
    %276 = vmatprep.subr.bf16.mxu0 0
    %277 = vmatpush1.bf16.msra.mxu0 %v267
    %278 = vmatprep.subr.bf16.mxu0 0
    %279 = vmatpush1.bf16.msra.mxu0 %v266
    %280 = vmatprep.subr.bf16.mxu0 0
    %281 = vmatpush1.bf16.msra.mxu0 %v265
    %282 = vmatprep.subr.bf16.mxu0 0
    %283 = vmatpush1.bf16.msra.mxu0 %v264
    %284 = vmatprep.subr.bf16.mxu0 0
    %285 = vmatpush1.bf16.msra.mxu0 %v263
    %286 = vmatprep.subr.bf16.mxu0 0
    %287 = vmatpush1.bf16.msra.mxu0 %v262
    %288 = vmatprep.subr.bf16.mxu0 0
    %289 = vmatpush1.bf16.msra.mxu0 %v261
    %290 = vmatprep.subr.bf16.mxu0 0
    %291 = vmatpush1.bf16.msra.mxu0 %v260
    %292 = vmatprep.subr.bf16.mxu0 0
    %293 = vmatpush2.bf16.msra.mxu0 0
    %294 = vmatprep.subr.bf16.mxu0 0
    %295 = vmatpush2.bf16.msra.mxu0 0
    %296 = vmatprep.subr.bf16.mxu0 0
    %297 = vmatpush2.bf16.msra.mxu0 0
    %298 = vmatprep.subr.bf16.mxu0 0
    %299 = vmatpush2.bf16.msra.mxu0 0
    %300 = vmatprep.subr.bf16.mxu0 0
    %301 = vmatpush2.bf16.msra.mxu0 0
    %302 = vmatprep.subr.bf16.mxu0 0
    %303 = vmatpush2.bf16.msra.mxu0 0
    %304 = vmatprep.subr.bf16.mxu0 0
    %305 = vmatpush2.bf16.msra.mxu0 0
    %306 = vmatprep.subr.bf16.mxu0 0
    %307 = vmatpush2.bf16.msra.mxu0 0
    %308 = vmatprep.mubr.bf16.mxu0 0
    %309 = vmatmul.mubr.bf16.gmra.mxu0 %v204
    %v310 = vpop.f32.mrf.mxu0
    %v311 = vadd.f32 %v226, %v310
    %v312 = vpop.f32.mrf.mxu0
    %v313 = vpop.f32.mrf.mxu0
    %v314 = vpop.f32.mrf.mxu0
    %315 = vdwg.mxu0
    %v316 = vxor.u32 %v311, 2147483648
    %v317 = vmul.f32 %v316, 1.442695
    %v318 = vpow.pop %v317
    %v319 = vadd.f32 %v318, 1.0
    %v320 = vrcp.pop %v319
    %v321 = vmul.f32 1.0, %v320
    %v322 = vmul.f32 %v311, %v321
    %v323 = vmul.f32 %v322, %v322
    %324 = vadd.xlane.f32.xlu0 %v323
    %v325 = vpop.xlane.xlu0 %324
    %v326 = vmul.f32 %v325, 0.0078125
    %v327 = vadd.f32 %v326, 1e-06
    %v328 = vrsqrt.pop %v327
    %v329 = vmul.f32 %v322, %v328
    %v330 = vmul.f32 %v329, %v202
    %v331 = vadd.f32 %v196, %v330
    %v332 = vpack.c.bf16 %v331, %v331
    %s333 = scalar_lea.vmem [#allocation7], 64
    %v334 = vld [vmem:[%s333] sm:$0xf]
    %v335 = vld [vmem:[%s333 + $0x4] sm:$0xf]
    %v336 = vld [vmem:[%s333 + $0x8] sm:$0xf]
    %v337 = vld [vmem:[%s333 + $0xc] sm:$0xf]
    %v338 = vld [vmem:[%s333 + $0x10] sm:$0xf]
    %v339 = vld [vmem:[%s333 + $0x14] sm:$0xf]
    %v340 = vld [vmem:[%s333 + $0x18] sm:$0xf]
    %v341 = vld [vmem:[%s333 + $0x1c] sm:$0xf]
    %v342 = vld [vmem:[%s333 + $0x20] sm:$0xf]
    %v343 = vld [vmem:[%s333 + $0x24] sm:$0xf]
    %v344 = vld [vmem:[%s333 + $0x28] sm:$0xf]
    %v345 = vld [vmem:[%s333 + $0x2c] sm:$0xf]
    %v346 = vld [vmem:[%s333 + $0x30] sm:$0xf]
    %v347 = vld [vmem:[%s333 + $0x34] sm:$0xf]
    %v348 = vld [vmem:[%s333 + $0x38] sm:$0xf]
    %v349 = vld [vmem:[%s333 + $0x3c] sm:$0xf]
    %s350 = scalar_lea.vmem %s4, 1
    %v351 = vld [vmem:[%s350] sm:$0x1]
    %v353 = vlaneseq
    %v354 = vshrl.u32 %v353, 7
    %v355 = vsub.s32 0, %v354
    %v356 = vrot.slane %v351, %v355
    %v374 = vunpack.c.l.b16 %v334
    %v375 = vunpack.c.l.b16 %v335
    %v376 = vunpack.c.l.b16 %v336
    %v377 = vunpack.c.l.b16 %v337
    %v378 = vunpack.c.l.b16 %v338
    %v379 = vunpack.c.l.b16 %v339
    %v380 = vunpack.c.l.b16 %v340
    %v381 = vunpack.c.l.b16 %v341
    %v382 = vunpack.c.l.b16 %v342
    %v383 = vunpack.c.l.b16 %v343
    %v384 = vunpack.c.l.b16 %v344
    %v385 = vunpack.c.l.b16 %v345
    %v386 = vunpack.c.l.b16 %v346
    %v387 = vunpack.c.l.b16 %v347
    %v388 = vunpack.c.l.b16 %v348
    %v389 = vunpack.c.l.b16 %v349
    %v390 = vpack.c.b16 %v375, %v374
    %v391 = vpack.c.b16 %v377, %v376
    %v392 = vpack.c.b16 %v379, %v378
    %v393 = vpack.c.b16 %v381, %v380
    %v394 = vpack.c.b16 %v383, %v382
    %v395 = vpack.c.b16 %v385, %v384
    %v396 = vpack.c.b16 %v387, %v386
    %v397 = vpack.c.b16 %v389, %v388
    %406 = vmatprep.subr.bf16.mxu0 0
    %407 = vmatpush1.bf16.msra.mxu0 %v397
    %408 = vmatprep.subr.bf16.mxu0 0
    %409 = vmatpush1.bf16.msra.mxu0 %v396
    %410 = vmatprep.subr.bf16.mxu0 0
    %411 = vmatpush1.bf16.msra.mxu0 %v395
    %412 = vmatprep.subr.bf16.mxu0 0
    %413 = vmatpush1.bf16.msra.mxu0 %v394
    %414 = vmatprep.subr.bf16.mxu0 0
    %415 = vmatpush1.bf16.msra.mxu0 %v393
    %416 = vmatprep.subr.bf16.mxu0 0
    %417 = vmatpush1.bf16.msra.mxu0 %v392
    %418 = vmatprep.subr.bf16.mxu0 0
    %419 = vmatpush1.bf16.msra.mxu0 %v391
    %420 = vmatprep.subr.bf16.mxu0 0
    %421 = vmatpush1.bf16.msra.mxu0 %v390
    %422 = vmatprep.subr.bf16.mxu0 0
    %423 = vmatpush2.bf16.msra.mxu0 0
    %424 = vmatprep.subr.bf16.mxu0 0
    %425 = vmatpush2.bf16.msra.mxu0 0
    %426 = vmatprep.subr.bf16.mxu0 0
    %427 = vmatpush2.bf16.msra.mxu0 0
    %428 = vmatprep.subr.bf16.mxu0 0
    %429 = vmatpush2.bf16.msra.mxu0 0
    %430 = vmatprep.subr.bf16.mxu0 0
    %431 = vmatpush2.bf16.msra.mxu0 0
    %432 = vmatprep.subr.bf16.mxu0 0
    %433 = vmatpush2.bf16.msra.mxu0 0
    %434 = vmatprep.subr.bf16.mxu0 0
    %435 = vmatpush2.bf16.msra.mxu0 0
    %436 = vmatprep.subr.bf16.mxu0 0
    %437 = vmatpush2.bf16.msra.mxu0 0
    %438 = vmatprep.mubr.bf16.mxu0 0
    %439 = vmatmul.mubr.bf16.gmra.mxu0 %v332
    %v440 = vpop.f32.mrf.mxu0
    %v441 = vadd.f32 %v356, %v440
    %v442 = vpop.f32.mrf.mxu0
    %v443 = vpop.f32.mrf.mxu0
    %v444 = vpop.f32.mrf.mxu0
    %445 = vdwg.mxu0
    %v446 = vxor.u32 %v441, 2147483648
    %v447 = vmul.f32 %v446, 1.442695
    %v448 = vpow.pop %v447
    %v449 = vadd.f32 %v448, 1.0
    %v450 = vrcp.pop %v449
    %v451 = vmul.f32 1.0, %v450
    %v452 = vmul.f32 %v441, %v451
    %v453 = vmul.f32 %v452, %v452
    %454 = vadd.xlane.f32.xlu0 %v453
    %v455 = vpop.xlane.xlu0 %454
    %v456 = vmul.f32 %v455, 0.0078125
    %v457 = vadd.f32 %v456, 1e-06
    %v458 = vrsqrt.pop %v457
    %v459 = vmul.f32 %v452, %v458
    %v460 = vmul.f32 %v459, %v202
    %v461 = vadd.f32 %v331, %v460
    %v462 = vpack.c.bf16 %v461, %v461
    %v463 = vld [vmem:[#allocation8] sm:$0xff]
    %v464 = vld [vmem:[#allocation8 + $0x8] sm:$0xff]
    %v465 = vld [vmem:[#allocation8 + $0x10] sm:$0xff]
    %v466 = vld [vmem:[#allocation8 + $0x18] sm:$0xff]
    %v467 = vld [vmem:[#allocation8 + $0x20] sm:$0xff]
    %v468 = vld [vmem:[#allocation8 + $0x28] sm:$0xff]
    %v469 = vld [vmem:[#allocation8 + $0x30] sm:$0xff]
    %v470 = vld [vmem:[#allocation8 + $0x38] sm:$0xff]
    %v471 = vld [vmem:[#allocation8 + $0x40] sm:$0xff]
    %v472 = vld [vmem:[#allocation8 + $0x48] sm:$0xff]
    %v473 = vld [vmem:[#allocation8 + $0x50] sm:$0xff]
    %v474 = vld [vmem:[#allocation8 + $0x58] sm:$0xff]
    %v475 = vld [vmem:[#allocation8 + $0x60] sm:$0xff]
    %v476 = vld [vmem:[#allocation8 + $0x68] sm:$0xff]
    %v477 = vld [vmem:[#allocation8 + $0x70] sm:$0xff]
    %v478 = vld [vmem:[#allocation8 + $0x78] sm:$0xff]
    %v479 = vld [vmem:[%s6] sm:$0x3]
    %v481 = vlaneseq
    %v482 = vshrl.u32 %v481, 7
    %v483 = vsub.s32 0, %v482
    %v484 = vrot.slane %v479, %v483
    %v485 = vlaneseq
    %v486 = vshrl.u32 %v485, 7
    %v487 = vsub.s32 1, %v486
    %v488 = vrot.slane %v479, %v487
    %v507 = vunpack.c.l.b16 %v463
    %v508 = vunpack.c.h.b16 %v463
    %v509 = vunpack.c.l.b16 %v464
    %v510 = vunpack.c.h.b16 %v464
    %v511 = vunpack.c.l.b16 %v465
    %v512 = vunpack.c.h.b16 %v465
    %v513 = vunpack.c.l.b16 %v466
    %v514 = vunpack.c.h.b16 %v466
    %v515 = vunpack.c.l.b16 %v467
    %v516 = vunpack.c.h.b16 %v467
    %v517 = vunpack.c.l.b16 %v468
    %v518 = vunpack.c.h.b16 %v468
    %v519 = vunpack.c.l.b16 %v469
    %v520 = vunpack.c.h.b16 %v469
    %v521 = vunpack.c.l.b16 %v470
    %v522 = vunpack.c.h.b16 %v470
    %v523 = vunpack.c.l.b16 %v471
    %v524 = vunpack.c.h.b16 %v471
    %v525 = vunpack.c.l.b16 %v472
    %v526 = vunpack.c.h.b16 %v472
    %v527 = vunpack.c.l.b16 %v473
    %v528 = vunpack.c.h.b16 %v473
    %v529 = vunpack.c.l.b16 %v474
    %v530 = vunpack.c.h.b16 %v474
    %v531 = vunpack.c.l.b16 %v475
    %v532 = vunpack.c.h.b16 %v475
    %v533 = vunpack.c.l.b16 %v476
    %v534 = vunpack.c.h.b16 %v476
    %v535 = vunpack.c.l.b16 %v477
    %v536 = vunpack.c.h.b16 %v477
    %v537 = vunpack.c.l.b16 %v478
    %v538 = vunpack.c.h.b16 %v478
    %v539 = vpack.c.b16 %v509, %v507
    %v540 = vpack.c.b16 %v510, %v508
    %v541 = vpack.c.b16 %v513, %v511
    %v542 = vpack.c.b16 %v514, %v512
    %v543 = vpack.c.b16 %v517, %v515
    %v544 = vpack.c.b16 %v518, %v516
    %v545 = vpack.c.b16 %v521, %v519
    %v546 = vpack.c.b16 %v522, %v520
    %v547 = vpack.c.b16 %v525, %v523
    %v548 = vpack.c.b16 %v526, %v524
    %v549 = vpack.c.b16 %v529, %v527
    %v550 = vpack.c.b16 %v530, %v528
    %v551 = vpack.c.b16 %v533, %v531
    %v552 = vpack.c.b16 %v534, %v532
    %v553 = vpack.c.b16 %v537, %v535
    %v554 = vpack.c.b16 %v538, %v536
    %571 = vmatprep.subr.bf16.mxu0 %v554
    %572 = vmatpush1.bf16.msra.mxu0 %v553
    %573 = vmatprep.subr.bf16.mxu0 %v552
    %574 = vmatpush1.bf16.msra.mxu0 %v551
    %575 = vmatprep.subr.bf16.mxu0 %v550
    %576 = vmatpush1.bf16.msra.mxu0 %v549
    %577 = vmatprep.subr.bf16.mxu0 %v548
    %578 = vmatpush1.bf16.msra.mxu0 %v547
    %579 = vmatprep.subr.bf16.mxu0 %v546
    %580 = vmatpush1.bf16.msra.mxu0 %v545
    %581 = vmatprep.subr.bf16.mxu0 %v544
    %582 = vmatpush1.bf16.msra.mxu0 %v543
    %583 = vmatprep.subr.bf16.mxu0 %v542
    %584 = vmatpush1.bf16.msra.mxu0 %v541
    %585 = vmatprep.subr.bf16.mxu0 %v540
    %586 = vmatpush1.bf16.msra.mxu0 %v539
    %587 = vmatprep.subr.bf16.mxu0 0
    %588 = vmatpush2.bf16.msra.mxu0 0
    %589 = vmatprep.subr.bf16.mxu0 0
    %590 = vmatpush2.bf16.msra.mxu0 0
    %591 = vmatprep.subr.bf16.mxu0 0
    %592 = vmatpush2.bf16.msra.mxu0 0
    %593 = vmatprep.subr.bf16.mxu0 0
    %594 = vmatpush2.bf16.msra.mxu0 0
    %595 = vmatprep.subr.bf16.mxu0 0
    %596 = vmatpush2.bf16.msra.mxu0 0
    %597 = vmatprep.subr.bf16.mxu0 0
    %598 = vmatpush2.bf16.msra.mxu0 0
    %599 = vmatprep.subr.bf16.mxu0 0
    %600 = vmatpush2.bf16.msra.mxu0 0
    %601 = vmatprep.subr.bf16.mxu0 0
    %602 = vmatpush2.bf16.msra.mxu0 0
    %603 = vmatprep.mubr.bf16.mxu0 0
    %604 = vmatmul.mubr.bf16.gmra.mxu0 %v462
    %v605 = vpop.f32.mrf.mxu0
    %v606 = vadd.f32 %v484, %v605
    %v607 = vpop.f32.mrf.mxu0
    %v608 = vadd.f32 %v488, %v607
    %v609 = vpop.f32.mrf.mxu0
    %v610 = vpop.f32.mrf.mxu0
    %611 = vdwg.mxu0
    %v612 = vpack.c.bf16 %v606, %v606
    %v613 = vpack.c.bf16 %v608, %v608
    %v616 = vunpack.c.l.b16 %v612
    %v617 = vunpack.c.l.b16 %v613
    %v618 = vpack.c.b16 %v617, %v616
    %620 = vst [vmem:[#allocation10] sm:$0xff] %v618
    // Predicated region
    $region50: #{tpu_custom_call.1} parent=1 // pred_check
      _
    $region51: #{tpu_custom_call.1} parent=1 // pred_check_branch
      %622 = sbr.rel (0) target = $region53
    $region52: #{tpu_custom_call.1} parent=1 // pred_region
      %s624 = ssub.s32 128, 128
      %625 = vsyncadd [#allocation4], %s624
      %s627 = sshll.u32 [#allocation10], 4
      %s628 = int_to_ptr.vmem [resolvable:$true] %s627
      %630 = dma.vmem_to_hbm [thread:$0]  %s628, 128, %s8, [#allocation4]
    $region53: #{tpu_custom_call.1} parent=1 // pred_fallthru
      _
    // Predicated region
    $region54: #{tpu_custom_call.1} parent=1 // pred_check
      _
    $region55: #{tpu_custom_call.1} parent=1 // pred_check_branch
      %632 = sbr.rel (0) target = $region57
    $region56: #{tpu_custom_call.1} parent=1 // pred_region
      %633 = dma.done [#allocation4], 128
    $region57: #{tpu_custom_call.1} parent=1 // pred_fallthru
      _
    %634 = vsyncpa [#allocation3], 1
    %635 = vsyncpa [#allocation6], 1
    %636 = vsyncpa [#allocation9], 1
    %637 = vsyncpa [#allocation4], 1

</llo_original>
